<compile_context>
chip_gen: v5e
topology: v5e:2x2
jax: 0.10.0
libtpu: 0.0.40
codegen_flags: <defaults>
</compile_context>

<pallas_src>
import functools

import jax
import jax.numpy as jnp
from jax.experimental import pallas as pl
from jax.experimental.pallas import tpu as pltpu


def _crps_kernel(yp_ref, y_ref, out_ref, acc_mae, acc_mix, *, inv_mae, inv_mix):
    i = pl.program_id(1)

    @pl.when(i == 0)
    def _init():
        acc_mae[...] = jnp.zeros_like(acc_mae)
        acc_mix[...] = jnp.zeros_like(acc_mix)

    x = yp_ref[...]           # (m, tile_n) f32, batch on lanes
    yt = y_ref[...]           # (1, tile_n) f32, broadcast over sublanes

    # |pred - target| accumulated elementwise (no per-tile reduction).
    acc_mae[...] += jnp.abs(x - yt)

    # Pairwise ensemble spread: sum_k |x[j, b] - x[k, b]|.  m is small, so the
    # static (unrolled) loop over k costs m*(m)*tile_n cheap VPU ops per tile.
    m = x.shape[0]
    mix_tile = jnp.abs(x - x[0:1, :])
    for k in range(1, m):
        mix_tile = mix_tile + jnp.abs(x - x[k:k + 1, :])
    acc_mix[...] += mix_tile

    @pl.when(i == pl.num_programs(1) - 1)
    def _finalize():
        # Single cross-lane reduce + scaling, once per core.
        partial = (jnp.sum(acc_mae[...]) * inv_mae
                   - jnp.sum(acc_mix[...]) * inv_mix)
        # Lane-dense (1, 8, 128) output block; wrapper reads element [0, 0].
        out_ref[...] = jnp.broadcast_to(partial, out_ref.shape)


def crps_loss(y_pred, y, *, tile_n=512):
    """CRPS loss.  y_pred: (n, m), y: (n, 1) or (n,).  Returns f32 scalar."""
    y_pred = jnp.asarray(y_pred, jnp.float32)
    n, m = y_pred.shape
    y = jnp.asarray(y, jnp.float32).reshape(n, 1)

    # Tile along the (lane-dense) batch axis in multiples of 128.
    tn = min(tile_n, ((n + 127) // 128) * 128)
    num_tiles = -(-n // tn)
    nc = 2 if num_tiles >= 2 else 1          # split tiles across 2 TCs (v7x)
    tiles_per_core = -(-num_tiles // nc)
    n_pad = nc * tiles_per_core * tn

    # Wrapper-side transpose + zero-pad (layout plumbing, not compute).
    # Zero-padded batch columns contribute 0 to both the MAE and MIX sums.
    yp_t = jnp.zeros((m, n_pad), jnp.float32).at[:, :n].set(y_pred.T)
    y_t = jnp.zeros((1, n_pad), jnp.float32).at[:, :n].set(y.T)

    kernel = functools.partial(
        _crps_kernel,
        inv_mae=1.0 / float(n * m),           # true (unpadded) divisors
        inv_mix=1.0 / float(2 * n * m * m),
    )

    out = pl.pallas_call(
        kernel,
        out_shape=jax.ShapeDtypeStruct((nc, 8, 128), jnp.float32),
        grid=(nc, tiles_per_core),
        in_specs=[
            pl.BlockSpec((m, tn), lambda c, i: (0, c * tiles_per_core + i)),
            pl.BlockSpec((1, tn), lambda c, i: (0, c * tiles_per_core + i)),
        ],
        out_specs=pl.BlockSpec((1, 8, 128), lambda c, i: (c, 0, 0)),
        scratch_shapes=[
            pltpu.VMEM((m, tn), jnp.float32),   # MAE accumulator
            pltpu.VMEM((m, tn), jnp.float32),   # MIX accumulator
        ],
        compiler_params=pltpu.CompilerParams(
            dimension_semantics=("parallel", "arbitrary"),
            vmem_limit_bytes=32 * 1024 * 1024,
        ),
    )(yp_t, y_t)

    # Sum per-core partials (division by constants already applied in-kernel).
    return jnp.sum(out[:, 0, 0])


def _reference_crps(y_pred, y):
    y_pred = jnp.asarray(y_pred, jnp.float32)
    n, m = y_pred.shape
    y = jnp.asarray(y, jnp.float32).reshape(n, 1)
    mae = jnp.mean(jnp.abs(y_pred - y))
    mix = jnp.sum(jnp.abs(y_pred[:, None, :] - y_pred[:, :, None])) / (
        n * 2.0 * m * m)
    return mae - mix


if __name__ == "__main__":
    key = jax.random.PRNGKey(0)
    k1, k2, k3, k4 = jax.random.split(key, 4)

    # Small shape implied by the module: batch=16 samples, ensemble=8 members.
    y_pred = jax.random.normal(k1, (16, 8), dtype=jnp.float32)
    y = jax.random.normal(k2, (16, 1), dtype=jnp.float32)

    loss = jax.block_until_ready(crps_loss(y_pred, y))
    ref = _reference_crps(y_pred, y)
    assert jnp.allclose(loss, ref, atol=1e-5, rtol=1e-5), (loss, ref)

    # Second check: exercises zero-padding, multi-tile accumulation and the
    # two-core "parallel" grid axis with an odd ensemble size.
    y_pred2 = jax.random.normal(k3, (300, 7), dtype=jnp.float32)
    y2 = jax.random.normal(k4, (300, 1), dtype=jnp.float32)
    loss2 = jax.block_until_ready(crps_loss(y_pred2, y2, tile_n=128))
    ref2 = _reference_crps(y_pred2, y2)
    assert jnp.allclose(loss2, ref2, atol=1e-5, rtol=1e-5), (loss2, ref2)

    print("KERNEL_OK")
</pallas_src>

<mosaic_0001>
module attributes {stable_mosaic.version = 11 : i64} {
  func.func @_crps_kernel(%arg0: i32, %arg1: i32, %arg2: memref<8x128xf32, #tpu.memory_space<vmem>>, %arg3: memref<1x128xf32, #tpu.memory_space<vmem>>, %arg4: memref<1x8x128xf32, #tpu.memory_space<vmem>>, %arg5: memref<8x128xf32, #tpu.memory_space<vmem>>, %arg6: memref<8x128xf32, #tpu.memory_space<vmem>>) attributes {dimension_semantics = [#tpu.dimension_semantics<parallel>, #tpu.dimension_semantics<arbitrary>], iteration_bounds = array<i64: 1, 1>, scalar_prefetch = 0 : i64, scratch_operands = 2 : i64, tpu.core_type = #tpu.core_type<tc>, window_params = [{transform_indices = @transform_0, window_bounds = array<i64: 8, 128>}, {transform_indices = @transform_1, window_bounds = array<i64: 1, 128>}, {transform_indices = @transform_2, window_bounds = array<i64: 1, 8, 128>}]} {
    %c0_i32 = arith.constant 0 : i32
    %0 = arith.cmpi eq, %arg1, %c0_i32 : i32
    %1 = arith.extui %0 : i1 to i32
    %c0_i32_0 = arith.constant 0 : i32
    %2 = arith.cmpi ne, %1, %c0_i32_0 : i32
    scf.if %2 {
      %cst = arith.constant 0.000000e+00 : f32
      %56 = vector.broadcast %cst : f32 to vector<8x128xf32>
      %c0_14 = arith.constant 0 : index
      %c0_15 = arith.constant 0 : index
      %57 = vector.load %arg5[%c0_14, %c0_15] : memref<8x128xf32, #tpu.memory_space<vmem>>, vector<8x128xf32>
      tpu.vector_store %arg5[%c0_14, %c0_15], %56 {strides = array<i32>} : memref<8x128xf32, #tpu.memory_space<vmem>>, vector<8x128xf32>,
      %cst_16 = arith.constant 0.000000e+00 : f32
      %58 = vector.broadcast %cst_16 : f32 to vector<8x128xf32>
      %c0_17 = arith.constant 0 : index
      %c0_18 = arith.constant 0 : index
      %59 = vector.load %arg6[%c0_17, %c0_18] : memref<8x128xf32, #tpu.memory_space<vmem>>, vector<8x128xf32>
      tpu.vector_store %arg6[%c0_17, %c0_18], %58 {strides = array<i32>} : memref<8x128xf32, #tpu.memory_space<vmem>>, vector<8x128xf32>,
    } else {
    }
    %c0 = arith.constant 0 : index
    %c0_1 = arith.constant 0 : index
    %3 = vector.load %arg2[%c0, %c0_1] : memref<8x128xf32, #tpu.memory_space<vmem>>, vector<8x128xf32>
    %c0_2 = arith.constant 0 : index
    %c0_3 = arith.constant 0 : index
    %4 = vector.load %arg3[%c0_2, %c0_3] : memref<1x128xf32, #tpu.memory_space<vmem>>, vector<1x128xf32>
    %c0_4 = arith.constant 0 : index
    %c0_5 = arith.constant 0 : index
    %5 = vector.load %arg5[%c0_4, %c0_5] : memref<8x128xf32, #tpu.memory_space<vmem>>, vector<8x128xf32>
    %6 = vector.broadcast %4 : vector<1x128xf32> to vector<8x128xf32>
    %7 = arith.subf %3, %6 : vector<8x128xf32>
    %8 = math.absf %7 : vector<8x128xf32>
    %9 = arith.addf %5, %8 : vector<8x128xf32>
    %c0_6 = arith.constant 0 : index
    %c0_7 = arith.constant 0 : index
    %10 = vector.load %arg5[%c0_6, %c0_7] : memref<8x128xf32, #tpu.memory_space<vmem>>, vector<8x128xf32>
    tpu.vector_store %arg5[%c0_6, %c0_7], %9 {strides = array<i32>} : memref<8x128xf32, #tpu.memory_space<vmem>>, vector<8x128xf32>,
    %11 = vector.extract_strided_slice %3 {offsets = [0, 0], sizes = [1, 128], strides = [1, 1]} : vector<8x128xf32> to vector<1x128xf32>
    %12 = vector.broadcast %11 : vector<1x128xf32> to vector<8x128xf32>
    %13 = arith.subf %3, %12 : vector<8x128xf32>
    %14 = math.absf %13 : vector<8x128xf32>
    %15 = vector.extract_strided_slice %3 {offsets = [1, 0], sizes = [1, 128], strides = [1, 1]} : vector<8x128xf32> to vector<1x128xf32>
    %16 = vector.broadcast %15 : vector<1x128xf32> to vector<8x128xf32>
    %17 = arith.subf %3, %16 : vector<8x128xf32>
    %18 = math.absf %17 : vector<8x128xf32>
    %19 = arith.addf %14, %18 : vector<8x128xf32>
    %20 = vector.extract_strided_slice %3 {offsets = [2, 0], sizes = [1, 128], strides = [1, 1]} : vector<8x128xf32> to vector<1x128xf32>
    %21 = vector.broadcast %20 : vector<1x128xf32> to vector<8x128xf32>
    %22 = arith.subf %3, %21 : vector<8x128xf32>
    %23 = math.absf %22 : vector<8x128xf32>
    %24 = arith.addf %19, %23 : vector<8x128xf32>
    %25 = vector.extract_strided_slice %3 {offsets = [3, 0], sizes = [1, 128], strides = [1, 1]} : vector<8x128xf32> to vector<1x128xf32>
    %26 = vector.broadcast %25 : vector<1x128xf32> to vector<8x128xf32>
    %27 = arith.subf %3, %26 : vector<8x128xf32>
    %28 = math.absf %27 : vector<8x128xf32>
    %29 = arith.addf %24, %28 : vector<8x128xf32>
    %30 = vector.extract_strided_slice %3 {offsets = [4, 0], sizes = [1, 128], strides = [1, 1]} : vector<8x128xf32> to vector<1x128xf32>
    %31 = vector.broadcast %30 : vector<1x128xf32> to vector<8x128xf32>
    %32 = arith.subf %3, %31 : vector<8x128xf32>
    %33 = math.absf %32 : vector<8x128xf32>
    %34 = arith.addf %29, %33 : vector<8x128xf32>
    %35 = vector.extract_strided_slice %3 {offsets = [5, 0], sizes = [1, 128], strides = [1, 1]} : vector<8x128xf32> to vector<1x128xf32>
    %36 = vector.broadcast %35 : vector<1x128xf32> to vector<8x128xf32>
    %37 = arith.subf %3, %36 : vector<8x128xf32>
    %38 = math.absf %37 : vector<8x128xf32>
    %39 = arith.addf %34, %38 : vector<8x128xf32>
    %40 = vector.extract_strided_slice %3 {offsets = [6, 0], sizes = [1, 128], strides = [1, 1]} : vector<8x128xf32> to vector<1x128xf32>
    %41 = vector.broadcast %40 : vector<1x128xf32> to vector<8x128xf32>
    %42 = arith.subf %3, %41 : vector<8x128xf32>
    %43 = math.absf %42 : vector<8x128xf32>
    %44 = arith.addf %39, %43 : vector<8x128xf32>
    %45 = vector.extract_strided_slice %3 {offsets = [7, 0], sizes = [1, 128], strides = [1, 1]} : vector<8x128xf32> to vector<1x128xf32>
    %46 = vector.broadcast %45 : vector<1x128xf32> to vector<8x128xf32>
    %47 = arith.subf %3, %46 : vector<8x128xf32>
    %48 = math.absf %47 : vector<8x128xf32>
    %49 = arith.addf %44, %48 : vector<8x128xf32>
    %c0_8 = arith.constant 0 : index
    %c0_9 = arith.constant 0 : index
    %50 = vector.load %arg6[%c0_8, %c0_9] : memref<8x128xf32, #tpu.memory_space<vmem>>, vector<8x128xf32>
    %51 = arith.addf %50, %49 : vector<8x128xf32>
    %c0_10 = arith.constant 0 : index
    %c0_11 = arith.constant 0 : index
    %52 = vector.load %arg6[%c0_10, %c0_11] : memref<8x128xf32, #tpu.memory_space<vmem>>, vector<8x128xf32>
    tpu.vector_store %arg6[%c0_10, %c0_11], %51 {strides = array<i32>} : memref<8x128xf32, #tpu.memory_space<vmem>>, vector<8x128xf32>,
    %c0_i32_12 = arith.constant 0 : i32
    %53 = arith.cmpi eq, %arg1, %c0_i32_12 : i32
    %54 = arith.extui %53 : i1 to i32
    %c0_i32_13 = arith.constant 0 : i32
    %55 = arith.cmpi ne, %54, %c0_i32_13 : i32
    scf.if %55 {
      %c0_14 = arith.constant 0 : index
      %c0_15 = arith.constant 0 : index
      %56 = vector.load %arg5[%c0_14, %c0_15] : memref<8x128xf32, #tpu.memory_space<vmem>>, vector<8x128xf32>
      %57 = vector.shape_cast %56 : vector<8x128xf32> to vector<1x8x128xf32>
      %cst = arith.constant dense<0.000000e+00> : vector<1xf32>
      %58 = vector.multi_reduction <add>, %57, %cst [1, 2] : vector<1x8x128xf32> to vector<1xf32>
      %59 = vector.shape_cast %58 : vector<1xf32> to vector<1x1x1xf32>
      %60 = vector.extract %59[0, 0, 0] : f32 from vector<1x1x1xf32>
      %cst_16 = arith.constant 7.812500e-03 : f32
      %61 = arith.mulf %60, %cst_16 : f32
      %c0_17 = arith.constant 0 : index
      %c0_18 = arith.constant 0 : index
      %62 = vector.load %arg6[%c0_17, %c0_18] : memref<8x128xf32, #tpu.memory_space<vmem>>, vector<8x128xf32>
      %63 = vector.shape_cast %62 : vector<8x128xf32> to vector<1x8x128xf32>
      %cst_19 = arith.constant dense<0.000000e+00> : vector<1xf32>
      %64 = vector.multi_reduction <add>, %63, %cst_19 [1, 2] : vector<1x8x128xf32> to vector<1xf32>
      %65 = vector.shape_cast %64 : vector<1xf32> to vector<1x1x1xf32>
      %66 = vector.extract %65[0, 0, 0] : f32 from vector<1x1x1xf32>
      %cst_20 = arith.constant 4.8828125E-4 : f32
      %67 = arith.mulf %66, %cst_20 : f32
      %68 = arith.subf %61, %67 : f32
      %69 = vector.broadcast %68 : f32 to vector<1x8x128xf32>
      %c0_21 = arith.constant 0 : index
      %c0_22 = arith.constant 0 : index
      %c0_23 = arith.constant 0 : index
      %70 = vector.load %arg4[%c0_21, %c0_22, %c0_23] : memref<1x8x128xf32, #tpu.memory_space<vmem>>, vector<1x8x128xf32>
      tpu.vector_store %arg4[%c0_21, %c0_22, %c0_23], %69 {strides = array<i32>} : memref<1x8x128xf32, #tpu.memory_space<vmem>>, vector<1x8x128xf32>,
    } else {
    }
    return
  }
  func.func @transform_0(%arg0: i32, %arg1: i32) -> (i32, i32) {
    %c1_i32 = arith.constant 1 : i32
    %0 = arith.muli %arg0, %c1_i32 : i32
    %1 = arith.addi %0, %arg1 : i32
    %c0_i32 = arith.constant 0 : i32
    %c0_i32_0 = arith.constant 0 : i32
    return %c0_i32, %1 : i32, i32
  }
  func.func @transform_1(%arg0: i32, %arg1: i32) -> (i32, i32) {
    %c1_i32 = arith.constant 1 : i32
    %0 = arith.muli %arg0, %c1_i32 : i32
    %1 = arith.addi %0, %arg1 : i32
    %c0_i32 = arith.constant 0 : i32
    %c0_i32_0 = arith.constant 0 : i32
    return %c0_i32, %1 : i32, i32
  }
  func.func @transform_2(%arg0: i32, %arg1: i32) -> (i32, i32, i32) {
    %c0_i32 = arith.constant 0 : i32
    %c0_i32_0 = arith.constant 0 : i32
    %c0_i32_1 = arith.constant 0 : i32
    return %arg0, %c0_i32, %c0_i32_0 : i32, i32, i32
  }
}

</mosaic_0001>

<llo_original>
// kernel: tpu_custom_call.1
$region0: #{tpu_custom_call.1}
  #allocation0 [shape = 'u32[]', space=smem, size = 0x4, offset = 0x4, fixed_abs, tag = 'smem constant byte address 0x4 - core index']
  #allocation1 [shape = 'u32[72,128]{1,0:T(1,128)}', space=vmem, size = 0x9000, scoped, tag = 'internal scratch']
  #allocation2 [shape = 'f32[8,128]{1,0:T(8,128)}', space=vmem, size = 0x1000, scoped, tag = 'scratch operand']
  #allocation3 [shape = 'f32[8,128]{1,0:T(8,128)}', space=vmem, size = 0x1000, scoped, tag = 'scratch operand']
  %s0 = inlined_call_operand.hbm [shape: f32[8,128], index: 0, kind: input, shape index: {}]
  %s1 = inlined_call_operand.hbm [shape: f32[1,128], index: 1, kind: input, shape index: {}]
  %s2 = inlined_call_operand.hbm [shape: f32[1,8,128], index: 2, kind: output, shape index: {}]
  %s3 = sld [smem:[#allocation0]]
  $region34: #{tpu_custom_call.1} parent=0
    _
  %s5 = ssub.s32 1, %s3
  %s6 = scalar_select 0, %s5, %s3
  $region1: #{tpu_custom_call.1} parent=0
    #allocation4 [shape = 'u8[4096]{0}', space=vmem, size = 0x1000, scoped, tag = 'input window, operand 0, single buffered']
    #allocation5 [shape = 's32[1]{0}', space=sflag, size = 0x4, scoped, tag = 'scoped memory for tpu_custom_call.1']
    #allocation6 [shape = 's32[1]{0}', space=sflag, size = 0x4, scoped, tag = 'scoped memory for tpu_custom_call.1']
    #allocation7 [shape = 'u8[512]{0}', space=vmem, size = 0x400, scoped, tag = 'input window, operand 1, single buffered']
    #allocation8 [shape = 's32[1]{0}', space=sflag, size = 0x4, scoped, tag = 'scoped memory for tpu_custom_call.1']
    #allocation9 [shape = 'u8[4096]{0}', space=vmem, size = 0x1000, scoped, tag = 'output window, operand 0, single buffered']
    %7 = vsyncpa [#allocation5], 0
    %8 = vsyncpa [#allocation8], 0
    %9 = vsyncpa [#allocation6], 0
    // Predicated region
    $region2: #{tpu_custom_call.1} parent=1 // pred_check
      _
    $region3: #{tpu_custom_call.1} parent=1 // pred_check_branch
      %11 = sbr.rel (0) target = $region5
    $region4: #{tpu_custom_call.1} parent=1 // pred_region
      %s12 = sadd.s32 0, 0
      %14 = vsyncadd [#allocation5], 0
      %s15 = smul.addr %s12, 8
      %s16 = scalar_lea.hbm %s0, %s15
      %s18 = sshll.u32 %s16, 4
      %s19 = int_to_ptr.hbm [resolvable:$true] %s18
      %s20 = sshll.u32 [#allocation4], 4
      %s21 = int_to_ptr.vmem [resolvable:$true] %s20
      %23 = dma.hbm_to_vmem [thread:$0]  %s19, 128, %s21, [#allocation5]
    $region5: #{tpu_custom_call.1} parent=1 // pred_fallthru
      _
    // Predicated region
    $region6: #{tpu_custom_call.1} parent=1 // pred_check
      _
    $region7: #{tpu_custom_call.1} parent=1 // pred_check_branch
      %25 = sbr.rel (0) target = $region9
    $region8: #{tpu_custom_call.1} parent=1 // pred_region
      %s26 = sadd.s32 0, 0
      %28 = vsyncadd [#allocation8], 0
      %s29 = scalar_lea.hbm %s1, %s26
      %s31 = sshll.u32 %s29, 4
      %s32 = int_to_ptr.hbm [resolvable:$true] %s31
      %s33 = sshll.u32 [#allocation7], 4
      %s34 = int_to_ptr.vmem [resolvable:$true] %s33
      %36 = dma.hbm_to_vmem [thread:$0]  %s32, 16, %s34, [#allocation8]
    $region9: #{tpu_custom_call.1} parent=1 // pred_fallthru
      _
    // Predicated region
    $region10: #{tpu_custom_call.1} parent=1 // pred_check
      _
    $region11: #{tpu_custom_call.1} parent=1 // pred_check_branch
      %38 = sbr.rel (0) target = $region13
    $region12: #{tpu_custom_call.1} parent=1 // pred_region
      %40 = dma.done [#allocation5], 128
    $region13: #{tpu_custom_call.1} parent=1 // pred_fallthru
      _
    // Predicated region
    $region14: #{tpu_custom_call.1} parent=1 // pred_check
      _
    $region15: #{tpu_custom_call.1} parent=1 // pred_check_branch
      %42 = sbr.rel (0) target = $region17
    $region16: #{tpu_custom_call.1} parent=1 // pred_region
      %44 = dma.done [#allocation8], 16
    $region17: #{tpu_custom_call.1} parent=1 // pred_fallthru
      _
    %s45 = sadd.s32 0, 0
    %s46 = sadd.s32 0, 0
    %p47 = scmp.eq.s32.totalorder 0, 0
    // Predicated region
    $region18: #{tpu_custom_call.1} parent=1 // pred_check
      %p48 = pneg %p47
    $region19: #{tpu_custom_call.1} parent=1 // pred_check_branch
      %50 = sbr.rel (%p48) target = $region21
    $region20: #{tpu_custom_call.1} parent=1 // pred_region
      %51 = vst [vmem:[#allocation2] sm:$0xff] 0.0
      %52 = vst [vmem:[#allocation3] sm:$0xff] 0.0
    $region21: #{tpu_custom_call.1} parent=1 // pred_fallthru
      _
    %v53 = vld [vmem:[#allocation4] sm:$0xff]
    %v54 = vld [vmem:[#allocation7] sm:$0x1]
    %v55 = vld [vmem:[#allocation2] sm:$0xff]
    %v57 = vperm.slane %v54, 0
    %v59 = vsub.f32 %v53, %v57
    %v60 = vand.u32 2147483647, %v59
    %v61 = vadd.f32 %v55, %v60
    %62 = vst [vmem:[#allocation2] sm:$0xff] %v61
    %v63 = vperm.slane %v53, 0
    %v64 = vsub.f32 %v53, %v63
    %v65 = vand.u32 2147483647, %v64
    %v66 = vperm.slane %v53, 1
    %v67 = vsub.f32 %v53, %v66
    %v68 = vand.u32 2147483647, %v67
    %v69 = vadd.f32 %v65, %v68
    %v70 = vperm.slane %v53, 2
    %v71 = vsub.f32 %v53, %v70
    %v72 = vand.u32 2147483647, %v71
    %v73 = vadd.f32 %v69, %v72
    %v74 = vperm.slane %v53, 3
    %v75 = vsub.f32 %v53, %v74
    %v76 = vand.u32 2147483647, %v75
    %v77 = vadd.f32 %v73, %v76
    %v78 = vperm.slane %v53, 4
    %v79 = vsub.f32 %v53, %v78
    %v80 = vand.u32 2147483647, %v79
    %v81 = vadd.f32 %v77, %v80
    %v82 = vperm.slane %v53, 5
    %v83 = vsub.f32 %v53, %v82
    %v84 = vand.u32 2147483647, %v83
    %v85 = vadd.f32 %v81, %v84
    %v86 = vperm.slane %v53, 6
    %v87 = vsub.f32 %v53, %v86
    %v88 = vand.u32 2147483647, %v87
    %v89 = vadd.f32 %v85, %v88
    %v90 = vperm.slane %v53, 7
    %v91 = vsub.f32 %v53, %v90
    %v92 = vand.u32 2147483647, %v91
    %v93 = vadd.f32 %v89, %v92
    %v94 = vld [vmem:[#allocation3] sm:$0xff]
    %v95 = vadd.f32 %v94, %v93
    %96 = vst [vmem:[#allocation3] sm:$0xff] %v95
    // Predicated region
    $region22: #{tpu_custom_call.1} parent=1 // pred_check
      %p97 = pneg %p47
    $region23: #{tpu_custom_call.1} parent=1 // pred_check_branch
      %99 = sbr.rel (%p97) target = $region25
    $region24: #{tpu_custom_call.1} parent=1 // pred_region
      %v100 = vld [vmem:[#allocation2] sm:$0xff]
      %101 = vadd.xlane.f32.xlu0 %v100
      %v102 = vpop.xlane.xlu0 %101
      %v103 = vrot.slane %v102, 4
      %v104 = vadd.f32 %v102, %v103
      %v105 = vrot.slane %v104, 2
      %v106 = vadd.f32 %v104, %v105
      %v107 = vrot.slane %v106, 1
      %v108 = vadd.f32 %v106, %v107
      %s109 = vtos %v108
      %s110 = smul.f32 %s109, 0.0078125
      %v111 = vld [vmem:[#allocation3] sm:$0xff]
      %112 = vadd.xlane.f32.xlu0 %v111
      %v113 = vpop.xlane.xlu0 %112
      %v114 = vrot.slane %v113, 4
      %v115 = vadd.f32 %v113, %v114
      %v116 = vrot.slane %v115, 2
      %v117 = vadd.f32 %v115, %v116
      %v118 = vrot.slane %v117, 1
      %v119 = vadd.f32 %v117, %v118
      %s120 = vtos %v119
      %s121 = smul.f32 %s120, 0.00048828125
      %s122 = ssub.f32 %s110, %s121
      %v123 = vstv %s122
      %124 = vst [vmem:[#allocation9] sm:$0xff] %v123
    $region25: #{tpu_custom_call.1} parent=1 // pred_fallthru
      _
    // Predicated region
    $region26: #{tpu_custom_call.1} parent=1 // pred_check
      _
    $region27: #{tpu_custom_call.1} parent=1 // pred_check_branch
      %126 = sbr.rel (0) target = $region29
    $region28: #{tpu_custom_call.1} parent=1 // pred_region
      %128 = vsyncadd [#allocation6], 0
      %s130 = sshll.u32 [#allocation9], 4
      %s131 = int_to_ptr.vmem [resolvable:$true] %s130
      %s132 = sshll.u32 %s2, 4
      %s133 = int_to_ptr.hbm [resolvable:$true] %s132
      %135 = dma.vmem_to_hbm [thread:$0]  %s131, 128, %s133, [#allocation6]
    $region29: #{tpu_custom_call.1} parent=1 // pred_fallthru
      _
    // Predicated region
    $region30: #{tpu_custom_call.1} parent=1 // pred_check
      _
    $region31: #{tpu_custom_call.1} parent=1 // pred_check_branch
      %137 = sbr.rel (0) target = $region33
    $region32: #{tpu_custom_call.1} parent=1 // pred_region
      %139 = dma.done [#allocation6], 128
    $region33: #{tpu_custom_call.1} parent=1 // pred_fallthru
      _
    %140 = vsyncpa [#allocation5], 1
    %141 = vsyncpa [#allocation8], 1
    %142 = vsyncpa [#allocation6], 1

</llo_original>
